<compile_context>
chip_gen: v6e
topology: v6e:2x2x1
jax: 0.10.0
libtpu: 0.0.40
codegen_flags: <defaults>
</compile_context>

<pallas_src>
import jax
import jax.numpy as jnp
from jax.experimental import pallas as pl
from jax.experimental.pallas import tpu as pltpu


def _disc_kernel(x_ref, w1_ref, b1_ref, w2_ref, b2_ref, o_ref):
    # x_ref : (TB, D_in)   w1_ref: (D_in, H)   b1_ref: (1, H)
    # w2_ref: (1, H)       b2_ref: (1,) SMEM   o_ref : (TB, 1)
    x = x_ref[...]

    # Linear(D_in -> 128) on the MXU, f32 accumulate.
    h = jnp.dot(x, w1_ref[...], preferred_element_type=jnp.float32) + b1_ref[...]
    # LeakyReLU(negative_slope=0.2)
    h = jnp.where(h > 0, h, 0.2 * h)

    # Linear(128 -> 1): broadcast multiply (VPU) + row reduction (XLU) instead of a
    # 1-column MXU matmul, plus SMEM scalar bias.
    z = jnp.sum(h * w2_ref[...], axis=-1, keepdims=True) + b2_ref[0]

    # Exact sigmoid (matches nn.Sigmoid). exp may transiently hit inf for very
    # negative z in masked garbage rows; the result saturates correctly and those
    # rows are masked on store.
    o_ref[...] = 1.0 / (1.0 + jnp.exp(-z))


def _select_tile(B, tb_req, d_in, hidden):
    """Pick the batch tile (multiple of 8) and an explicit scoped-VMEM limit."""
    # Round requested tile to a multiple of 8 (f32 sublane); never exceed batch.
    tb = max(8, (int(tb_req) // 8) * 8)
    b8 = ((B + 7) // 8) * 8
    tb = min(tb, b8)

    # Keep >= ~4 grid tiles when the batch allows, so the "parallel" batch axis can
    # shard across both v7x TensorCores (harmless on single-TC v5e/v6e).
    if b8 >= 4 * 8:
        quarter = ((-(-B // 4)) + 7) // 8 * 8
        tb = min(tb, max(8, quarter))

    # VMEM guard (binding case: v7x 64 MiB physical / 32 MiB scoped default).
    #   x:   double-buffered (tb, d_in) f32 tiles
    #   W1:  (d_in, 128) f32, counted 2x to be safe
    #   out: (tb, 1) f32 tile, lane-padded to 128, double-buffered
    fixed = 2 * d_in * hidden * 4 + 4 * hidden * 4 + (64 << 10)
    per_row = 2 * d_in * 4 + 2 * 128 * 4
    budget = 24 << 20
    if fixed + per_row * tb > budget:
        tb_max = (budget - fixed) // per_row
        # TODO(synk): if even tb=8 does not fit (huge d_in), add a d_in reduction grid
        # axis ("arbitrary", last) with a (tb, hidden) f32 accumulator scratch.
        tb = max(8, min(tb, (tb_max // 8) * 8))

    vmem_need = fixed + per_row * tb
    vmem_limit = int(min(vmem_need + (4 << 20), 48 << 20))
    return tb, vmem_limit


def discriminator_forward(img, w1, b1, w2, b2, *, tb=2048):
    """img: (B, C, H, W) float32 (NCHW, like PyTorch). Returns (B, 1) validity.

    w1: (D_in, 128), b1: (128,), w2: (128, 1), b2: (1,)  (i.e. y = x @ W + b).
    """
    B = img.shape[0]
    d_in, hidden = w1.shape

    # Glue: flatten exactly like img.view(B, -1). No padding / slicing in the wrapper.
    x = img.reshape(B, -1).astype(jnp.float32)
    assert x.shape[1] == d_in

    tb, vmem_limit = _select_tile(B, tb, d_in, hidden)

    w1_f = w1.astype(jnp.float32)
    b1_2d = b1.reshape(1, hidden).astype(jnp.float32)
    w2_row = w2.reshape(1, hidden).astype(jnp.float32)   # (hidden, 1) -> (1, hidden)
    b2_1d = b2.reshape(1).astype(jnp.float32)

    grid = (pl.cdiv(B, tb),)
    out = pl.pallas_call(
        _disc_kernel,
        out_shape=jax.ShapeDtypeStruct((B, 1), jnp.float32),
        grid_spec=pltpu.PrefetchScalarGridSpec(
            num_scalar_prefetch=0,
            grid=grid,
            in_specs=[
                pl.BlockSpec((tb, d_in), lambda i: (i, 0)),         # x: batch-tiled
                pl.BlockSpec((d_in, hidden), lambda i: (0, 0)),     # W1: resident
                pl.BlockSpec((1, hidden), lambda i: (0, 0)),        # b1: resident
                pl.BlockSpec((1, hidden), lambda i: (0, 0)),        # w2 row: resident
                pl.BlockSpec(memory_space=pltpu.MemorySpace.SMEM),  # b2 scalar
            ],
            out_specs=pl.BlockSpec((tb, 1), lambda i: (i, 0)),
        ),
        compiler_params=pltpu.CompilerParams(
            dimension_semantics=("parallel",),   # independent batch tiles -> 2 TCs on v7x
            vmem_limit_bytes=vmem_limit,
        ),
    )(x, w1_f, b1_2d, w2_row, b2_1d)
    return out


def _reference(img, w1, b1, w2, b2):
    x = img.reshape(img.shape[0], -1)
    h = x @ w1 + b1
    h = jnp.where(h > 0, h, 0.2 * h)
    return jax.nn.sigmoid(h @ w2 + b2.reshape(1, 1))


if __name__ == "__main__":
    # Small shapes consistent with the module: img_shape = (C, H, W) = (1, 16, 16)
    # -> Linear(prod(img_shape)=256 -> 128) -> LeakyReLU(0.2) -> Linear(128 -> 1) -> Sigmoid
    B, C, H, W = 2, 1, 16, 16
    D_IN = C * H * W      # 256
    HID = 128

    key = jax.random.PRNGKey(0)
    k_img, k_w1, k_b1, k_w2, k_b2, k_img2 = jax.random.split(key, 6)

    img = jax.random.normal(k_img, (B, C, H, W), dtype=jnp.float32)

    # Deterministic synthetic parameters (PyTorch-Linear-like uniform init scale).
    lim1 = 1.0 / (D_IN ** 0.5)
    lim2 = 1.0 / (HID ** 0.5)
    w1 = jax.random.uniform(k_w1, (D_IN, HID), minval=-lim1, maxval=lim1, dtype=jnp.float32)
    b1 = jax.random.uniform(k_b1, (HID,), minval=-lim1, maxval=lim1, dtype=jnp.float32)
    w2 = jax.random.uniform(k_w2, (HID, 1), minval=-lim2, maxval=lim2, dtype=jnp.float32)
    b2 = jax.random.uniform(k_b2, (1,), minval=-lim2, maxval=lim2, dtype=jnp.float32)

    # Case 1: tiny batch (single ragged tile, rows 2..7 masked on store).
    validity = discriminator_forward(img, w1, b1, w2, b2)
    validity = jax.block_until_ready(validity)
    ref = _reference(img, w1, b1, w2, b2)
    assert validity.shape == (B, 1)
    assert jnp.allclose(validity, ref, atol=1e-5, rtol=1e-5)

    # Case 2: multi-tile path with a ragged last tile and a non-multiple-of-8 user tb
    # (tb=100 rounds to 96; grid masking handles the last partial tile without padding).
    B2 = 300
    img2 = jax.random.normal(k_img2, (B2, C, H, W), dtype=jnp.float32)
    validity2 = discriminator_forward(img2, w1, b1, w2, b2, tb=100)
    validity2 = jax.block_until_ready(validity2)
    ref2 = _reference(img2, w1, b1, w2, b2)
    assert validity2.shape == (B2, 1)
    assert jnp.allclose(validity2, ref2, atol=1e-5, rtol=1e-5)

    print("KERNEL_OK")
</pallas_src>

<mosaic_0001>
module attributes {stable_mosaic.version = 11 : i64} {
  func.func @_disc_kernel(%arg0: i32, %arg1: memref<8x256xf32, #tpu.memory_space<vmem>>, %arg2: memref<256x128xf32, #tpu.memory_space<vmem>>, %arg3: memref<1x128xf32, #tpu.memory_space<vmem>>, %arg4: memref<1x128xf32, #tpu.memory_space<vmem>>, %arg5: memref<1xf32, #tpu.memory_space<smem>>, %arg6: memref<8x1xf32, #tpu.memory_space<vmem>>) attributes {dimension_semantics = [#tpu.dimension_semantics<parallel>], iteration_bounds = array<i64: 1>, scalar_prefetch = 0 : i64, scratch_operands = 0 : i64, tpu.core_type = #tpu.core_type<tc>, window_params = [{transform_indices = @transform_0, window_bounds = array<i64: 8, 256>}, {pipeline_mode = #tpu.pipeline_mode<synchronous>, transform_indices = @transform_1, window_bounds = array<i64: 256, 128>}, {pipeline_mode = #tpu.pipeline_mode<synchronous>, transform_indices = @transform_2, window_bounds = array<i64: 1, 128>}, {pipeline_mode = #tpu.pipeline_mode<synchronous>, transform_indices = @transform_3, window_bounds = array<i64: 1, 128>}, {transform_indices = @transform_4, window_bounds = array<i64: 1>}, {transform_indices = @transform_5, window_bounds = array<i64: 8, 1>}]} {
    %c0 = arith.constant 0 : index
    %c0_0 = arith.constant 0 : index
    %0 = vector.load %arg1[%c0, %c0_0] : memref<8x256xf32, #tpu.memory_space<vmem>>, vector<8x256xf32>
    %c0_1 = arith.constant 0 : index
    %c0_2 = arith.constant 0 : index
    %1 = vector.load %arg2[%c0_1, %c0_2] : memref<256x128xf32, #tpu.memory_space<vmem>>, vector<256x128xf32>
    %cst = arith.constant dense<0.000000e+00> : vector<8x128xf32>
    %2 = tpu.matmul %0, %1, %cst {dimension_numbers = #tpu.dot_dimension_numbers<[1], [0], [0], [1], [0, 0, 1, 1], [], []>} : vector<8x256xf32>, vector<256x128xf32>, vector<8x128xf32> -> vector<8x128xf32>
    %c0_3 = arith.constant 0 : index
    %c0_4 = arith.constant 0 : index
    %3 = vector.load %arg3[%c0_3, %c0_4] : memref<1x128xf32, #tpu.memory_space<vmem>>, vector<1x128xf32>
    %4 = vector.broadcast %3 : vector<1x128xf32> to vector<8x128xf32>
    %5 = arith.addf %2, %4 : vector<8x128xf32>
    %cst_5 = arith.constant 0.000000e+00 : f32
    %6 = vector.broadcast %cst_5 : f32 to vector<8x128xf32>
    %7 = arith.cmpf ogt, %5, %6 : vector<8x128xf32>
    %cst_6 = arith.constant 2.000000e-01 : f32
    %8 = vector.broadcast %cst_6 : f32 to vector<8x128xf32>
    %9 = arith.mulf %8, %5 : vector<8x128xf32>
    %10 = arith.select %7, %5, %9 : vector<8x128xi1>, vector<8x128xf32>
    %c0_7 = arith.constant 0 : index
    %c0_8 = arith.constant 0 : index
    %11 = vector.load %arg4[%c0_7, %c0_8] : memref<1x128xf32, #tpu.memory_space<vmem>>, vector<1x128xf32>
    %12 = vector.broadcast %11 : vector<1x128xf32> to vector<8x128xf32>
    %13 = arith.mulf %10, %12 : vector<8x128xf32>
    %cst_9 = arith.constant dense<0.000000e+00> : vector<8xf32>
    %14 = vector.multi_reduction <add>, %13, %cst_9 [1] : vector<8x128xf32> to vector<8xf32>
    %15 = vector.shape_cast %14 : vector<8xf32> to vector<8x1xf32>
    %c0_10 = arith.constant 0 : index
    %16 = memref.load %arg5[%c0_10] : memref<1xf32, #tpu.memory_space<smem>>
    %17 = vector.broadcast %16 : f32 to vector<8x1xf32>
    %18 = arith.addf %15, %17 : vector<8x1xf32>
    %cst_11 = arith.constant 0.000000e+00 : f32
    %19 = vector.broadcast %cst_11 : f32 to vector<8x1xf32>
    %20 = arith.subf %19, %18 : vector<8x1xf32>
    %21 = math.exp %20 : vector<8x1xf32>
    %cst_12 = arith.constant 1.000000e+00 : f32
    %22 = vector.broadcast %cst_12 : f32 to vector<8x1xf32>
    %23 = arith.addf %22, %21 : vector<8x1xf32>
    %cst_13 = arith.constant 1.000000e+00 : f32
    %24 = vector.broadcast %cst_13 : f32 to vector<8x1xf32>
    %25 = arith.divf %24, %23 : vector<8x1xf32>
    %c0_14 = arith.constant 0 : index
    %c0_15 = arith.constant 0 : index
    %26 = vector.load %arg6[%c0_14, %c0_15] : memref<8x1xf32, #tpu.memory_space<vmem>>, vector<8x1xf32>
    tpu.vector_store %arg6[%c0_14, %c0_15], %25 {strides = array<i32>} : memref<8x1xf32, #tpu.memory_space<vmem>>, vector<8x1xf32>,
    return
  }
  func.func @transform_0(%arg0: i32) -> (i32, i32) {
    %c0_i32 = arith.constant 0 : i32
    %c0_i32_0 = arith.constant 0 : i32
    return %arg0, %c0_i32 : i32, i32
  }
  func.func @transform_1(%arg0: i32) -> (i32, i32) {
    %c0_i32 = arith.constant 0 : i32
    %c0_i32_0 = arith.constant 0 : i32
    %c0_i32_1 = arith.constant 0 : i32
    return %c0_i32, %c0_i32_0 : i32, i32
  }
  func.func @transform_2(%arg0: i32) -> (i32, i32) {
    %c0_i32 = arith.constant 0 : i32
    %c0_i32_0 = arith.constant 0 : i32
    %c0_i32_1 = arith.constant 0 : i32
    return %c0_i32, %c0_i32_0 : i32, i32
  }
  func.func @transform_3(%arg0: i32) -> (i32, i32) {
    %c0_i32 = arith.constant 0 : i32
    %c0_i32_0 = arith.constant 0 : i32
    %c0_i32_1 = arith.constant 0 : i32
    return %c0_i32, %c0_i32_0 : i32, i32
  }
  func.func @transform_4(%arg0: i32) -> i32 {
    %c0_i32 = arith.constant 0 : i32
    %c0_i32_0 = arith.constant 0 : i32
    return %c0_i32 : i32
  }
  func.func @transform_5(%arg0: i32) -> (i32, i32) {
    %c0_i32 = arith.constant 0 : i32
    %c0_i32_0 = arith.constant 0 : i32
    return %arg0, %c0_i32 : i32, i32
  }
}

</mosaic_0001>

<llo_original>
// kernel: tpu_custom_call.1
$region0: #{tpu_custom_call.1}
  #allocation0 [shape = 'u32[]', space=smem, size = 0x4, offset = 0x4, fixed_abs, tag = 'smem constant byte address 0x4 - core index']
  #allocation1 [shape = 'u32[144,128]{1,0:T(1,128)}', space=vmem, size = 0x12000, scoped, tag = 'internal scratch']
  #allocation2 [shape = 'f32[1]{0:T(128)S(6)}', space=smem, size = 0x200, scoped, tag = 'scoped memory for tpu_custom_call.1']
  %s0 = inlined_call_operand.hbm [shape: f32[2,256], index: 0, kind: input, shape index: {}]
  %s1 = inlined_call_operand.hbm [shape: f32[256,128], index: 1, kind: input, shape index: {}]
  %s2 = inlined_call_operand.vmem [shape: f32[1,128], index: 2, kind: input, shape index: {}]
  %s3 = inlined_call_operand.vmem [shape: f32[1,128], index: 3, kind: input, shape index: {}]
  %s4 = inlined_call_operand.<no memory space> [shape: f32[1], index: 4, kind: input, shape index: {}]
  %s5 = inlined_call_operand.vmem [shape: f32[2,1], index: 5, kind: output, shape index: {}]
  %s6 = sld [smem:[#allocation0]]
  $region68: #{tpu_custom_call.1} parent=0
    _
  %s8 = ssub.s32 1, %s6
  %s9 = scalar_select 0, %s8, %s6
  %10 = sst [smem:[#allocation2]] %s4
  $region1: #{tpu_custom_call.1} parent=0
    #allocation3 [shape = 'u8[8192]{0}', space=vmem, size = 0x2000, scoped, tag = 'input window, operand 0, single buffered']
    #allocation4 [shape = 's32[1]{0}', space=sflag, size = 0x4, scoped, tag = 'scoped memory for tpu_custom_call.1']
    #allocation5 [shape = 'u8[131072]{0}', space=vmem, size = 0x20000, scoped, tag = 'input window, operand 1, single buffered']
    #allocation6 [shape = 's32[1]{0}', space=sflag, size = 0x4, scoped, tag = 'scoped memory for tpu_custom_call.1']
    #allocation7 [shape = 'u8[4096]{0}', space=vmem, size = 0x1000, scoped, tag = 'output window, operand 0, single buffered']
    %11 = vsyncpa [#allocation4], 0
    %12 = vsyncpa [#allocation6], 0
    // Predicated region
    $region2: #{tpu_custom_call.1} parent=1 // pred_check
      _
    $region3: #{tpu_custom_call.1} parent=1 // pred_check_branch
      %14 = sbr.rel (0) target = $region5
    $region4: #{tpu_custom_call.1} parent=1 // pred_region
      %s16 = ssub.s32 256, 64
      %17 = vsyncadd [#allocation4], %s16
      %s18 = sshll.u32 [#allocation3], 4
      %s19 = int_to_ptr.vmem [resolvable:$true] %s18
      %24 = dma.hbm_to_vmem [thread:$0]  %s0, 64, %s19, [#allocation4], 64, 64, 4
    $region5: #{tpu_custom_call.1} parent=1 // pred_fallthru
      _
    // Predicated region
    $region6: #{tpu_custom_call.1} parent=1 // pred_check
      _
    $region7: #{tpu_custom_call.1} parent=1 // pred_check_branch
      %26 = sbr.rel (0) target = $region9
    $region8: #{tpu_custom_call.1} parent=1 // pred_region
      %s28 = ssub.s32 4096, 4096
      %29 = vsyncadd [#allocation6], %s28
      %s30 = sshll.u32 [#allocation5], 4
      %s31 = int_to_ptr.vmem [resolvable:$true] %s30
      %36 = dma.hbm_to_vmem [thread:$0]  %s1, 4096, %s31, [#allocation6], 128, 128, 8
    $region9: #{tpu_custom_call.1} parent=1 // pred_fallthru
      _
    // Predicated region
    $region10: #{tpu_custom_call.1} parent=1 // pred_check
      _
    $region11: #{tpu_custom_call.1} parent=1 // pred_check_branch
      %38 = sbr.rel (0) target = $region13
    $region12: #{tpu_custom_call.1} parent=1 // pred_region
      _
    $region13: #{tpu_custom_call.1} parent=1 // pred_fallthru
      _
    // Predicated region
    $region14: #{tpu_custom_call.1} parent=1 // pred_check
      _
    $region15: #{tpu_custom_call.1} parent=1 // pred_check_branch
      %40 = sbr.rel (0) target = $region17
    $region16: #{tpu_custom_call.1} parent=1 // pred_region
      _
    $region17: #{tpu_custom_call.1} parent=1 // pred_fallthru
      _
    // Predicated region
    $region18: #{tpu_custom_call.1} parent=1 // pred_check
      _
    $region19: #{tpu_custom_call.1} parent=1 // pred_check_branch
      %42 = sbr.rel (0) target = $region21
    $region20: #{tpu_custom_call.1} parent=1 // pred_region
      _
    $region21: #{tpu_custom_call.1} parent=1 // pred_fallthru
      _
    // Predicated region
    $region22: #{tpu_custom_call.1} parent=1 // pred_check
      _
    $region23: #{tpu_custom_call.1} parent=1 // pred_check_branch
      %44 = sbr.rel (0) target = $region25
    $region24: #{tpu_custom_call.1} parent=1 // pred_region
      %45 = dma.done [#allocation4], 256
    $region25: #{tpu_custom_call.1} parent=1 // pred_fallthru
      _
    // Predicated region
    $region26: #{tpu_custom_call.1} parent=1 // pred_check
      _
    $region27: #{tpu_custom_call.1} parent=1 // pred_check_branch
      %47 = sbr.rel (0) target = $region29
    $region28: #{tpu_custom_call.1} parent=1 // pred_region
      %48 = dma.done [#allocation6], 4096
    $region29: #{tpu_custom_call.1} parent=1 // pred_fallthru
      _
    %v49 = vld [vmem:[#allocation3] sm:$0xf]
    %v50 = vld [vmem:[#allocation3 + $0x4] sm:$0xf]
    %v51 = vld [vmem:[#allocation3 + $0x8] sm:$0xf]
    %v52 = vld [vmem:[#allocation3 + $0xc] sm:$0xf]
    %v53 = vld [vmem:[#allocation5] sm:$0xff]
    %v54 = vld [vmem:[#allocation5 + $0x8] sm:$0xff]
    %v55 = vld [vmem:[#allocation5 + $0x10] sm:$0xff]
    %v56 = vld [vmem:[#allocation5 + $0x18] sm:$0xff]
    %v57 = vld [vmem:[#allocation5 + $0x20] sm:$0xff]
    %v58 = vld [vmem:[#allocation5 + $0x28] sm:$0xff]
    %v59 = vld [vmem:[#allocation5 + $0x30] sm:$0xff]
    %v60 = vld [vmem:[#allocation5 + $0x38] sm:$0xff]
    %v61 = vld [vmem:[#allocation5 + $0x40] sm:$0xff]
    %v62 = vld [vmem:[#allocation5 + $0x48] sm:$0xff]
    %v63 = vld [vmem:[#allocation5 + $0x50] sm:$0xff]
    %v64 = vld [vmem:[#allocation5 + $0x58] sm:$0xff]
    %v65 = vld [vmem:[#allocation5 + $0x60] sm:$0xff]
    %v66 = vld [vmem:[#allocation5 + $0x68] sm:$0xff]
    %v67 = vld [vmem:[#allocation5 + $0x70] sm:$0xff]
    %v68 = vld [vmem:[#allocation5 + $0x78] sm:$0xff]
    %v69 = vld [vmem:[#allocation5 + $0x80] sm:$0xff]
    %v70 = vld [vmem:[#allocation5 + $0x88] sm:$0xff]
    %v71 = vld [vmem:[#allocation5 + $0x90] sm:$0xff]
    %v72 = vld [vmem:[#allocation5 + $0x98] sm:$0xff]
    %v73 = vld [vmem:[#allocation5 + $0xa0] sm:$0xff]
    %v74 = vld [vmem:[#allocation5 + $0xa8] sm:$0xff]
    %v75 = vld [vmem:[#allocation5 + $0xb0] sm:$0xff]
    %v76 = vld [vmem:[#allocation5 + $0xb8] sm:$0xff]
    %v77 = vld [vmem:[#allocation5 + $0xc0] sm:$0xff]
    %v78 = vld [vmem:[#allocation5 + $0xc8] sm:$0xff]
    %v79 = vld [vmem:[#allocation5 + $0xd0] sm:$0xff]
    %v80 = vld [vmem:[#allocation5 + $0xd8] sm:$0xff]
    %v81 = vld [vmem:[#allocation5 + $0xe0] sm:$0xff]
    %v82 = vld [vmem:[#allocation5 + $0xe8] sm:$0xff]
    %v83 = vld [vmem:[#allocation5 + $0xf0] sm:$0xff]
    %v84 = vld [vmem:[#allocation5 + $0xf8] sm:$0xff]
    %v85 = vld [vmem:[%s2] sm:$0x1]
    %v87 = vlaneseq
    %v88 = vshrl.u32 %v87, 7
    %v89 = vsub.s32 0, %v88
    %v90 = vrot.slane %v85, %v89
    %v96 = vcombine.low %v49, %v50
    %v97 = vcombine.low %v51, %v52
    %v99 = vunpack.c.l.s4 1983009808
    %v100 = vunpack.c.0.s8 %v99
    %v101 = vlaneseq
    %v102 = vshrl.u32 %v101, 7
    %v103 = vsub.s32 %v100, %v102
    %v104 = vrot.slane %v96, %v103
    %v106 = vunpack.c.l.s4 1983009808
    %v107 = vunpack.c.0.s8 %v106
    %v108 = vlaneseq
    %v109 = vshrl.u32 %v108, 7
    %v110 = vsub.s32 %v107, %v109
    %v111 = vrot.slane %v97, %v110
    %v112 = vcombine.low %v104, %v111
    %v113 = vcombine.high %v104, %v111
    %116 = vmatprep.subr.mxu0 0.0
    %117 = vmatpush1.msra.mxu0 %v68
    %118 = vmatprep.subr.mxu0 0.0
    %119 = vmatpush1.msra.mxu0 %v67
    %120 = vmatprep.subr.mxu0 0.0
    %121 = vmatpush1.msra.mxu0 %v66
    %122 = vmatprep.subr.mxu0 0.0
    %123 = vmatpush1.msra.mxu0 %v65
    %124 = vmatprep.subr.mxu0 0.0
    %125 = vmatpush1.msra.mxu0 %v64
    %126 = vmatprep.subr.mxu0 0.0
    %127 = vmatpush1.msra.mxu0 %v63
    %128 = vmatprep.subr.mxu0 0.0
    %129 = vmatpush1.msra.mxu0 %v62
    %130 = vmatprep.subr.mxu0 0.0
    %131 = vmatpush1.msra.mxu0 %v61
    %132 = vmatprep.subr.mxu0 0.0
    %133 = vmatpush1.msra.mxu0 %v60
    %134 = vmatprep.subr.mxu0 0.0
    %135 = vmatpush1.msra.mxu0 %v59
    %136 = vmatprep.subr.mxu0 0.0
    %137 = vmatpush1.msra.mxu0 %v58
    %138 = vmatprep.subr.mxu0 0.0
    %139 = vmatpush1.msra.mxu0 %v57
    %140 = vmatprep.subr.mxu0 0.0
    %141 = vmatpush1.msra.mxu0 %v56
    %142 = vmatprep.subr.mxu0 0.0
    %143 = vmatpush1.msra.mxu0 %v55
    %144 = vmatprep.subr.mxu0 0.0
    %145 = vmatpush1.msra.mxu0 %v54
    %146 = vmatprep.subr.mxu0 0.0
    %147 = vmatpush1.msra.mxu0 %v53
    %148 = vmatprep.subr.mxu0 0.0
    %149 = vmatpush2.msra.mxu0 %v84
    %150 = vmatprep.subr.mxu0 0.0
    %151 = vmatpush2.msra.mxu0 %v83
    %152 = vmatprep.subr.mxu0 0.0
    %153 = vmatpush2.msra.mxu0 %v82
    %154 = vmatprep.subr.mxu0 0.0
    %155 = vmatpush2.msra.mxu0 %v81
    %156 = vmatprep.subr.mxu0 0.0
    %157 = vmatpush2.msra.mxu0 %v80
    %158 = vmatprep.subr.mxu0 0.0
    %159 = vmatpush2.msra.mxu0 %v79
    %160 = vmatprep.subr.mxu0 0.0
    %161 = vmatpush2.msra.mxu0 %v78
    %162 = vmatprep.subr.mxu0 0.0
    %163 = vmatpush2.msra.mxu0 %v77
    %164 = vmatprep.subr.mxu0 0.0
    %165 = vmatpush2.msra.mxu0 %v76
    %166 = vmatprep.subr.mxu0 0.0
    %167 = vmatpush2.msra.mxu0 %v75
    %168 = vmatprep.subr.mxu0 0.0
    %169 = vmatpush2.msra.mxu0 %v74
    %170 = vmatprep.subr.mxu0 0.0
    %171 = vmatpush2.msra.mxu0 %v73
    %172 = vmatprep.subr.mxu0 0.0
    %173 = vmatpush2.msra.mxu0 %v72
    %174 = vmatprep.subr.mxu0 0.0
    %175 = vmatpush2.msra.mxu0 %v71
    %176 = vmatprep.subr.mxu0 0.0
    %177 = vmatpush2.msra.mxu0 %v70
    %178 = vmatprep.subr.mxu0 0.0
    %179 = vmatpush2.msra.mxu0 %v69
    %180 = vmatprep.mubr.f32.mxu0 %v113
    %181 = vmatmul.mubr.f32.gmra.mxu0 %v112
    %v182 = vpop.f32.mrf.mxu0
    %v183 = vadd.f32 %v90, %v182
    %v184 = vpop.f32.mrf.mxu0
    %185 = vdwg.mxu0
    %vm186 = vcmp.gt.f32.partialorder %v183, 0.0
    %v187 = vmul.f32 %v183, 0.2
    %v188 = vsel %vm186, %v183, %v187
    %v189 = vld [vmem:[%s3] sm:$0x1]
    %v191 = vlaneseq
    %v192 = vshrl.u32 %v191, 7
    %v193 = vsub.s32 0, %v192
    %v194 = vrot.slane %v189, %v193
    %v196 = vmul.f32 %v188, %v194
    %197 = vadd.xlane.f32.xlu0 %v196
    %v198 = vpop.xlane.xlu0 %197
    %s199 = sld [smem:[#allocation2]]
    %v200 = vstv %s199
    %v201 = vadd.f32 %v198, %v200
    %v202 = vsub.f32 0.0, %v201
    %v203 = vmul.f32 %v202, 1.442695
    %v204 = vpow.pop %v203
    %v205 = vadd.f32 %v204, 1.0
    %v206 = vrcp.pop %v205
    %v207 = vmul.f32 1.0, %v206
    %vm208 = vcmask 7168
    %209 = vst.msk [vmem:[#allocation7] sm:$0xff] %vm208, %v207
    // Predicated region
    $region30: #{tpu_custom_call.1} parent=1 // pred_check
      _
    $region31: #{tpu_custom_call.1} parent=1 // pred_check_branch
      %211 = sbr.rel (0) target = $region33
    $region32: #{tpu_custom_call.1} parent=1 // pred_region
      // Predicated region
      $region34: #{tpu_custom_call.1} parent=32 // pred_check
        _
      $region35: #{tpu_custom_call.1} parent=32 // pred_check_branch
        %213 = sbr.rel (0) target = $region37
      $region36: #{tpu_custom_call.1} parent=32 // pred_region
        // Predicated region
        $region38: #{tpu_custom_call.1} parent=36 // pred_check
          _
        $region39: #{tpu_custom_call.1} parent=36 // pred_check_branch
          %215 = sbr.rel target = $region41
        $region40: #{tpu_custom_call.1} parent=36 // pred_region
          // Predicated region
          $region53: #{tpu_custom_call.1} parent=40 // pred_check
            _
          $region54: #{tpu_custom_call.1} parent=40 // pred_check_branch
            %231 = sbr.rel (0) target = $region56
          $region55: #{tpu_custom_call.1} parent=40 // pred_region
            %s233 = ssub.s32 4, 1
            loop: start=0, step=1, limit=1
            $region57: #{tpu_custom_call.1} parent=55 // loop_pre_header
              _
            $region58: #{tpu_custom_call.1} parent=55 // loop_header
              %s235 = sphi 0, %s239
              %p236 = scmp.ge.s32.totalorder %s235, 1
              %s240 = sphi [#allocation7], [#allocation7]
              %s241 = sphi %s5, %s5
            $region59: #{tpu_custom_call.1} parent=55 // loop_header_branch
              %238 = sbr.rel (%p236) target = $region63
            $region60: #{tpu_custom_call.1} parent=55 // loop_body
              %v242 = vld [vmem:[%s240] sm:%s233]
              %243 = vst [vmem:[%s241] sm:%s233] %v242
            $region61: #{tpu_custom_call.1} parent=55 // loop_footer
              %s239 = sadd.s32 1, %s235
            $region62: #{tpu_custom_call.1} parent=55 // loop_footer_branch
              %234 = sbr.rel target = $region58
            $region63: #{tpu_custom_call.1} parent=55 // loop_exit
              _
          $region56: #{tpu_custom_call.1} parent=40 // pred_fallthru
            _
        $region41: #{tpu_custom_call.1} parent=36 // pred_fallthru
          _
        // Predicated region
        $region42: #{tpu_custom_call.1} parent=36 // pred_check
          _
        $region43: #{tpu_custom_call.1} parent=36 // pred_check_branch
          %217 = sbr.rel (0) target = $region45
        $region44: #{tpu_custom_call.1} parent=36 // pred_region
          %s219 = ssub.s32 4, 1
          loop: start=0, step=1, limit=1
          $region46: #{tpu_custom_call.1} parent=44 // loop_pre_header
            _
          $region47: #{tpu_custom_call.1} parent=44 // loop_header
            %s221 = sphi 0, %s225
            %p222 = scmp.ge.s32.totalorder %s221, 1
            %s226 = sphi [#allocation7], [#allocation7]
            %s227 = sphi %s5, %s5
          $region48: #{tpu_custom_call.1} parent=44 // loop_header_branch
            %224 = sbr.rel (%p222) target = $region52
          $region49: #{tpu_custom_call.1} parent=44 // loop_body
            %v228 = vld [vmem:[%s226] sm:%s219]
            %229 = vst [vmem:[%s227] sm:%s219] %v228
          $region50: #{tpu_custom_call.1} parent=44 // loop_footer
            %s225 = sadd.s32 1, %s221
          $region51: #{tpu_custom_call.1} parent=44 // loop_footer_branch
            %220 = sbr.rel target = $region47
          $region52: #{tpu_custom_call.1} parent=44 // loop_exit
            _
        $region45: #{tpu_custom_call.1} parent=36 // pred_fallthru
          _
      $region37: #{tpu_custom_call.1} parent=32 // pred_fallthru
        _
      %244 = vnop
    $region33: #{tpu_custom_call.1} parent=1 // pred_fallthru
      _
    // Predicated region
    $region64: #{tpu_custom_call.1} parent=1 // pred_check
      _
    $region65: #{tpu_custom_call.1} parent=1 // pred_check_branch
      %246 = sbr.rel (0) target = $region67
    $region66: #{tpu_custom_call.1} parent=1 // pred_region
      _
    $region67: #{tpu_custom_call.1} parent=1 // pred_fallthru
      _
    %247 = vsyncpa [#allocation4], 1
    %248 = vsyncpa [#allocation6], 1

</llo_original>
